<compile_context>
chip_gen: v7x
topology: tpu7x:2x2x1
jax: 0.10.0
libtpu: 0.0.40
codegen_flags: <defaults>
</compile_context>

<pallas_src>
import numpy as np
import jax
import jax.numpy as jnp
from jax import lax
from jax.experimental import pallas as pl
from jax.experimental.pallas import tpu as pltpu

BN_EPS = 1e-5


def _row_toeplitz(w, wp):
    """torch conv weight (Cout, Cin, 3, 3) -> (3, (Wp+2)*Cin, Wp*Cout) block-banded bf16.

    T[ky, jp*Cin + c, j*Cout + co] = w[co, c, ky, jp - j] if 0 <= jp - j <= 2 else 0,
    so  out_rows = sum_ky pad_rows[ky] @ T[ky]  is the padding=1 conv along the width.
    """
    cout, cin = w.shape[0], w.shape[1]
    wk = jnp.transpose(w, (2, 3, 1, 0))                       # (ky, kx, Cin, Cout)
    jp = np.arange(wp + 2)[:, None]                           # padded-width index
    j = np.arange(wp)[None, :]                                # output-width index
    kx = jp - j                                               # (Wp+2, Wp)
    valid = jnp.asarray((kx >= 0) & (kx <= 2), jnp.float32)
    blocks = wk[:, np.clip(kx, 0, 2)] * valid[None, :, :, None, None]   # (3,Wp+2,Wp,Cin,Cout)
    t = jnp.transpose(blocks, (0, 1, 3, 2, 4))                # (ky, jp, Cin, j, Cout)
    return t.reshape(3, (wp + 2) * cin, wp * cout).astype(jnp.bfloat16)


def _make_down_kernel(N, Hp, Wp, Cin, Cmid, Cout):
    rows = N * Hp
    inv_m = 1.0 / (rows * Wp)                                 # BN batch size = N*Hp*Wp

    def store_padded(pad_ref, act, c):
        # In-register width pad (one zero column block per side) + a single
        # full-lane-width interior store; only the two row halos are zero-stored.
        zcol = jnp.zeros((rows, c), jnp.bfloat16)
        prow = jnp.concatenate([zcol, act.astype(jnp.bfloat16), zcol], axis=1)
        pad_ref[:, 1:Hp + 1, :] = prow.reshape(N, Hp, (Wp + 2) * c)
        zrow = jnp.zeros((N, 1, (Wp + 2) * c), jnp.bfloat16)
        pad_ref[:, 0:1, :] = zrow
        pad_ref[:, Hp + 1:Hp + 2, :] = zrow

    def conv_bn_relu(pad_ref, t_ref, g_ref, b_ref, cin, cout):
        lane_pad = (Wp + 2) * cin
        # 3x3 conv = 3 row-band bf16 MXU matmuls, f32 accumulation.
        acc = None
        for ky in range(3):
            lhs = pad_ref[:, ky:ky + Hp, :].reshape(rows, lane_pad)          # bf16
            d = jnp.dot(lhs, t_ref[ky], preferred_element_type=jnp.float32)  # (rows, Wp*cout)
            acc = d if acc is None else acc + d

        # Training-mode BatchNorm2d (biased variance) + ReLU; two-pass, all f32 on the VPU.
        def fold_channels(v):  # (1, Wp*cout) per-(j,c) sums -> per-channel, re-tiled to lanes
            tot = v[:, 0:cout]
            for j in range(1, Wp):
                tot = tot + v[:, j * cout:(j + 1) * cout]
            tot = tot * inv_m
            return jnp.concatenate([tot] * Wp, axis=1)

        mean = fold_channels(jnp.sum(acc, axis=0, keepdims=True))
        cen = acc - mean
        var = fold_channels(jnp.sum(cen * cen, axis=0, keepdims=True))
        y = cen * lax.rsqrt(var + BN_EPS) * g_ref[...] + b_ref[...]
        return jnp.maximum(y, 0.0)

    def kernel(x4_ref, t1_ref, g1_ref, b1_ref, t2_ref, g2_ref, b2_ref,
               out_ref, pad1_ref, pad2_ref):
        # ---- MaxPool2d(2): max of the four (dy, dx) lane slabs (compare in f32) ------
        li = Wp * Cin
        slabs = [x4_ref[:, k * li:(k + 1) * li].astype(jnp.float32) for k in range(4)]
        pooled = jnp.maximum(jnp.maximum(slabs[0], slabs[1]),
                             jnp.maximum(slabs[2], slabs[3]))        # (rows, Wp*Cin)

        # ---- conv1 -> BN -> ReLU ------------------------------------------------------
        store_padded(pad1_ref, pooled, Cin)
        y1 = conv_bn_relu(pad1_ref, t1_ref, g1_ref, b1_ref, Cin, Cmid)

        # ---- conv2 -> BN -> ReLU ------------------------------------------------------
        store_padded(pad2_ref, y1, Cmid)
        y2 = conv_bn_relu(pad2_ref, t2_ref, g2_ref, b2_ref, Cmid, Cout)

        out_ref[...] = y2          # lane-dense (N*Hp, Wp*Cout) output slab

    return kernel


def down_forward(x_nchw, params):
    """Down.forward(x): NCHW in, NCHW out (PyTorch semantics, training-mode BN)."""
    w1, g1, b1, w2, g2, b2 = params
    N, Cin, H, W = x_nchw.shape
    assert H % 2 == 0 and W % 2 == 0, "MaxPool2d(2) path assumes even H, W"
    Hp, Wp = H // 2, W // 2
    Cmid, Cout = g1.shape[-1], g2.shape[-1]
    rows = N * Hp

    # ---- wrapper-side layout glue (plain XLA ops) -------------------------------------
    # lanes = (dy, dx, j, c): the four 2x2 pool-window slabs sit in contiguous lane blocks.
    x6 = x_nchw.reshape(N, Cin, Hp, 2, Wp, 2)                 # (n, c, i, dy, j, dx)
    x4 = jnp.transpose(x6, (0, 2, 3, 5, 4, 1))                # (n, i, dy, dx, j, c)
    x4 = x4.reshape(rows, 4 * Wp * Cin).astype(jnp.bfloat16)

    t1 = _row_toeplitz(w1, Wp)                                # (3, (Wp+2)*Cin,  Wp*Cmid)
    t2 = _row_toeplitz(w2, Wp)                                # (3, (Wp+2)*Cmid, Wp*Cout)
    # BatchNorm affine params tiled to the (j, c) lane structure.
    g1l = jnp.tile(g1.astype(jnp.float32), Wp).reshape(1, Wp * Cmid)
    b1l = jnp.tile(b1.astype(jnp.float32), Wp).reshape(1, Wp * Cmid)
    g2l = jnp.tile(g2.astype(jnp.float32), Wp).reshape(1, Wp * Cout)
    b2l = jnp.tile(b2.astype(jnp.float32), Wp).reshape(1, Wp * Cout)

    kernel = _make_down_kernel(N, Hp, Wp, Cin, Cmid, Cout)
    out2d = pl.pallas_call(
        kernel,
        out_shape=jax.ShapeDtypeStruct((rows, Wp * Cout), jnp.float32),
        in_specs=[pl.BlockSpec(memory_space=pltpu.MemorySpace.VMEM)] * 7,
        out_specs=pl.BlockSpec(memory_space=pltpu.MemorySpace.VMEM),
        scratch_shapes=[
            pltpu.VMEM((N, Hp + 2, (Wp + 2) * Cin), jnp.bfloat16),   # zero-halo pooled act
            pltpu.VMEM((N, Hp + 2, (Wp + 2) * Cmid), jnp.bfloat16),  # zero-halo conv1 act
        ],
    )(x4, t1, g1l, b1l, t2, g2l, b2l)

    # lane-dense slab -> NCHW
    return jnp.transpose(out2d.reshape(N, Hp, Wp, Cout), (0, 3, 1, 2))


def ref_down(x, w1, g1, b1, w2, g2, b2):
    """Pure-JAX reference mirroring the PyTorch Down.forward (training-mode BN)."""
    xp = lax.reduce_window(x, -jnp.inf, lax.max, (1, 1, 2, 2), (1, 1, 2, 2), "VALID")

    def conv_bn_relu(h, w, g, b):
        y = lax.conv_general_dilated(
            h, w, window_strides=(1, 1), padding=((1, 1), (1, 1)),
            dimension_numbers=("NCHW", "OIHW", "NCHW"),
            precision=lax.Precision.HIGHEST)
        mean = y.mean(axis=(0, 2, 3), keepdims=True)
        var = ((y - mean) ** 2).mean(axis=(0, 2, 3), keepdims=True)
        yn = (y - mean) / jnp.sqrt(var + BN_EPS)
        yn = yn * g.reshape(1, -1, 1, 1) + b.reshape(1, -1, 1, 1)
        return jnp.maximum(yn, 0.0)

    h1 = conv_bn_relu(xp, w1, g1, b1)
    return conv_bn_relu(h1, w2, g2, b2)


if __name__ == "__main__":
    key = jax.random.PRNGKey(0)
    kx, kw1, kw2 = jax.random.split(key, 3)

    N, Cin, H, W = 2, 4, 16, 16      # Down(in_channels=4, out_channels=8)
    Cout = 8

    x = jax.random.normal(kx, (N, Cin, H, W), jnp.float32)
    # Deterministic synthetic parameters (Kaiming-like conv init, PyTorch BN defaults).
    w1 = jax.random.normal(kw1, (Cout, Cin, 3, 3), jnp.float32) * np.sqrt(2.0 / (Cin * 9))
    w2 = jax.random.normal(kw2, (Cout, Cout, 3, 3), jnp.float32) * np.sqrt(2.0 / (Cout * 9))
    g1 = jnp.ones((Cout,), jnp.float32)
    b1 = jnp.zeros((Cout,), jnp.float32)
    g2 = jnp.ones((Cout,), jnp.float32)
    b2 = jnp.zeros((Cout,), jnp.float32)
    params = (w1, g1, b1, w2, g2, b2)

    out = jax.block_until_ready(down_forward(x, params))
    ref = jax.block_until_ready(ref_down(x, *params))

    assert out.shape == (N, Cout, H // 2, W // 2), out.shape
    # bf16 input / weights at the MXU (f32 accumulation, f32 BN) vs an f32 HIGHEST
    # reference: the 2e-2 tolerance is the documented accuracy/perf tradeoff.
    np.testing.assert_allclose(np.asarray(out), np.asarray(ref), rtol=2e-2, atol=2e-2)
    print("KERNEL_OK")
</pallas_src>

<mosaic_0001>
module attributes {stable_mosaic.version = 11 : i64} {
  func.func @kernel(%arg0: memref<16x128xbf16, #tpu.memory_space<vmem>>, %arg1: memref<3x40x64xbf16, #tpu.memory_space<vmem>>, %arg2: memref<1x64xf32, #tpu.memory_space<vmem>>, %arg3: memref<1x64xf32, #tpu.memory_space<vmem>>, %arg4: memref<3x80x64xbf16, #tpu.memory_space<vmem>>, %arg5: memref<1x64xf32, #tpu.memory_space<vmem>>, %arg6: memref<1x64xf32, #tpu.memory_space<vmem>>, %arg7: memref<16x64xf32, #tpu.memory_space<vmem>>, %arg8: memref<2x10x40xbf16, #tpu.memory_space<vmem>>, %arg9: memref<2x10x80xbf16, #tpu.memory_space<vmem>>) attributes {dimension_semantics = [], scalar_prefetch = 0 : i64, scratch_operands = 2 : i64, tpu.core_type = #tpu.core_type<tc>} {
    %c0 = arith.constant 0 : index
    %c0_0 = arith.constant 0 : index
    %0 = vector.load %arg0[%c0, %c0_0] : memref<16x128xbf16, #tpu.memory_space<vmem>>, vector<16x32xbf16>
    %1 = arith.extf %0 : vector<16x32xbf16> to vector<16x32xf32>
    %c0_1 = arith.constant 0 : index
    %c32 = arith.constant 32 : index
    %2 = vector.load %arg0[%c0_1, %c32] : memref<16x128xbf16, #tpu.memory_space<vmem>>, vector<16x32xbf16>
    %3 = arith.extf %2 : vector<16x32xbf16> to vector<16x32xf32>
    %c0_2 = arith.constant 0 : index
    %c64 = arith.constant 64 : index
    %4 = vector.load %arg0[%c0_2, %c64] : memref<16x128xbf16, #tpu.memory_space<vmem>>, vector<16x32xbf16>
    %5 = arith.extf %4 : vector<16x32xbf16> to vector<16x32xf32>
    %c0_3 = arith.constant 0 : index
    %c96 = arith.constant 96 : index
    %6 = vector.load %arg0[%c0_3, %c96] : memref<16x128xbf16, #tpu.memory_space<vmem>>, vector<16x32xbf16>
    %7 = arith.extf %6 : vector<16x32xbf16> to vector<16x32xf32>
    %8 = arith.maximumf %1, %3 : vector<16x32xf32>
    %9 = arith.maximumf %5, %7 : vector<16x32xf32>
    %10 = arith.maximumf %8, %9 : vector<16x32xf32>
    %cst = arith.constant 0.000000e+00 : bf16
    %11 = vector.broadcast %cst : bf16 to vector<16x4xbf16>
    %12 = arith.truncf %10 : vector<16x32xf32> to vector<16x32xbf16>
    %13 = tpu.concatenate %11, %12, %11 in 1 : vector<16x4xbf16>, vector<16x32xbf16>, vector<16x4xbf16> -> vector<16x40xbf16>
    %14 = vector.shape_cast %13 : vector<16x40xbf16> to vector<2x8x40xbf16>
    %c0_4 = arith.constant 0 : index
    %c1 = arith.constant 1 : index
    %c0_5 = arith.constant 0 : index
    %15 = vector.load %arg8[%c0_4, %c1, %c0_5] : memref<2x10x40xbf16, #tpu.memory_space<vmem>>, vector<2x8x40xbf16>
    tpu.vector_store %arg8[%c0_4, %c1, %c0_5], %14 {strides = array<i32>} : memref<2x10x40xbf16, #tpu.memory_space<vmem>>, vector<2x8x40xbf16>,
    %cst_6 = arith.constant 0.000000e+00 : bf16
    %16 = vector.broadcast %cst_6 : bf16 to vector<2x1x40xbf16>
    %c0_7 = arith.constant 0 : index
    %c0_8 = arith.constant 0 : index
    %c0_9 = arith.constant 0 : index
    %17 = vector.load %arg8[%c0_7, %c0_8, %c0_9] : memref<2x10x40xbf16, #tpu.memory_space<vmem>>, vector<2x1x40xbf16>
    tpu.vector_store %arg8[%c0_7, %c0_8, %c0_9], %16 {strides = array<i32>} : memref<2x10x40xbf16, #tpu.memory_space<vmem>>, vector<2x1x40xbf16>,
    %c0_10 = arith.constant 0 : index
    %c9 = arith.constant 9 : index
    %c0_11 = arith.constant 0 : index
    %18 = vector.load %arg8[%c0_10, %c9, %c0_11] : memref<2x10x40xbf16, #tpu.memory_space<vmem>>, vector<2x1x40xbf16>
    tpu.vector_store %arg8[%c0_10, %c9, %c0_11], %16 {strides = array<i32>} : memref<2x10x40xbf16, #tpu.memory_space<vmem>>, vector<2x1x40xbf16>,
    %c0_12 = arith.constant 0 : index
    %c0_13 = arith.constant 0 : index
    %c0_14 = arith.constant 0 : index
    %19 = vector.load %arg8[%c0_12, %c0_13, %c0_14] : memref<2x10x40xbf16, #tpu.memory_space<vmem>>, vector<2x8x40xbf16>
    %20 = vector.shape_cast %19 : vector<2x8x40xbf16> to vector<16x40xbf16>
    %c0_15 = arith.constant 0 : index
    %c0_16 = arith.constant 0 : index
    %c0_17 = arith.constant 0 : index
    %21 = vector.load %arg1[%c0_15, %c0_16, %c0_17] : memref<3x40x64xbf16, #tpu.memory_space<vmem>>, vector<1x40x64xbf16>
    %22 = vector.shape_cast %21 : vector<1x40x64xbf16> to vector<40x64xbf16>
    %cst_18 = arith.constant dense<0.000000e+00> : vector<16x64xf32>
    %23 = tpu.matmul %20, %22, %cst_18 {dimension_numbers = #tpu.dot_dimension_numbers<[1], [0], [0], [1], [0, 0, 1, 1], [], []>} : vector<16x40xbf16>, vector<40x64xbf16>, vector<16x64xf32> -> vector<16x64xf32>
    %c0_19 = arith.constant 0 : index
    %c1_20 = arith.constant 1 : index
    %c0_21 = arith.constant 0 : index
    %24 = vector.load %arg8[%c0_19, %c1_20, %c0_21] : memref<2x10x40xbf16, #tpu.memory_space<vmem>>, vector<2x8x40xbf16>
    %25 = vector.shape_cast %24 : vector<2x8x40xbf16> to vector<16x40xbf16>
    %c1_22 = arith.constant 1 : index
    %c0_23 = arith.constant 0 : index
    %c0_24 = arith.constant 0 : index
    %26 = vector.load %arg1[%c1_22, %c0_23, %c0_24] : memref<3x40x64xbf16, #tpu.memory_space<vmem>>, vector<1x40x64xbf16>
    %27 = vector.shape_cast %26 : vector<1x40x64xbf16> to vector<40x64xbf16>
    %cst_25 = arith.constant dense<0.000000e+00> : vector<16x64xf32>
    %28 = tpu.matmul %25, %27, %cst_25 {dimension_numbers = #tpu.dot_dimension_numbers<[1], [0], [0], [1], [0, 0, 1, 1], [], []>} : vector<16x40xbf16>, vector<40x64xbf16>, vector<16x64xf32> -> vector<16x64xf32>
    %29 = arith.addf %23, %28 : vector<16x64xf32>
    %c0_26 = arith.constant 0 : index
    %c2 = arith.constant 2 : index
    %c0_27 = arith.constant 0 : index
    %30 = vector.load %arg8[%c0_26, %c2, %c0_27] : memref<2x10x40xbf16, #tpu.memory_space<vmem>>, vector<2x8x40xbf16>
    %31 = vector.shape_cast %30 : vector<2x8x40xbf16> to vector<16x40xbf16>
    %c2_28 = arith.constant 2 : index
    %c0_29 = arith.constant 0 : index
    %c0_30 = arith.constant 0 : index
    %32 = vector.load %arg1[%c2_28, %c0_29, %c0_30] : memref<3x40x64xbf16, #tpu.memory_space<vmem>>, vector<1x40x64xbf16>
    %33 = vector.shape_cast %32 : vector<1x40x64xbf16> to vector<40x64xbf16>
    %cst_31 = arith.constant dense<0.000000e+00> : vector<16x64xf32>
    %34 = tpu.matmul %31, %33, %cst_31 {dimension_numbers = #tpu.dot_dimension_numbers<[1], [0], [0], [1], [0, 0, 1, 1], [], []>} : vector<16x40xbf16>, vector<40x64xbf16>, vector<16x64xf32> -> vector<16x64xf32>
    %35 = arith.addf %29, %34 : vector<16x64xf32>
    %cst_32 = arith.constant dense<0.000000e+00> : vector<64xf32>
    %36 = vector.multi_reduction <add>, %35, %cst_32 [0] : vector<16x64xf32> to vector<64xf32>
    %37 = vector.shape_cast %36 : vector<64xf32> to vector<1x64xf32>
    %38 = vector.extract_strided_slice %37 {offsets = [0, 0], sizes = [1, 8], strides = [1, 1]} : vector<1x64xf32> to vector<1x8xf32>
    %39 = vector.extract_strided_slice %37 {offsets = [0, 8], sizes = [1, 8], strides = [1, 1]} : vector<1x64xf32> to vector<1x8xf32>
    %40 = arith.addf %38, %39 : vector<1x8xf32>
    %41 = vector.extract_strided_slice %37 {offsets = [0, 16], sizes = [1, 8], strides = [1, 1]} : vector<1x64xf32> to vector<1x8xf32>
    %42 = arith.addf %40, %41 : vector<1x8xf32>
    %43 = vector.extract_strided_slice %37 {offsets = [0, 24], sizes = [1, 8], strides = [1, 1]} : vector<1x64xf32> to vector<1x8xf32>
    %44 = arith.addf %42, %43 : vector<1x8xf32>
    %45 = vector.extract_strided_slice %37 {offsets = [0, 32], sizes = [1, 8], strides = [1, 1]} : vector<1x64xf32> to vector<1x8xf32>
    %46 = arith.addf %44, %45 : vector<1x8xf32>
    %47 = vector.extract_strided_slice %37 {offsets = [0, 40], sizes = [1, 8], strides = [1, 1]} : vector<1x64xf32> to vector<1x8xf32>
    %48 = arith.addf %46, %47 : vector<1x8xf32>
    %49 = vector.extract_strided_slice %37 {offsets = [0, 48], sizes = [1, 8], strides = [1, 1]} : vector<1x64xf32> to vector<1x8xf32>
    %50 = arith.addf %48, %49 : vector<1x8xf32>
    %51 = vector.extract_strided_slice %37 {offsets = [0, 56], sizes = [1, 8], strides = [1, 1]} : vector<1x64xf32> to vector<1x8xf32>
    %52 = arith.addf %50, %51 : vector<1x8xf32>
    %cst_33 = arith.constant 7.812500e-03 : f32
    %53 = vector.broadcast %cst_33 : f32 to vector<1x8xf32>
    %54 = arith.mulf %52, %53 : vector<1x8xf32>
    %55 = tpu.concatenate %54, %54, %54, %54, %54, %54, %54, %54 in 1 : vector<1x8xf32>, vector<1x8xf32>, vector<1x8xf32>, vector<1x8xf32>, vector<1x8xf32>, vector<1x8xf32>, vector<1x8xf32>, vector<1x8xf32> -> vector<1x64xf32>
    %56 = vector.broadcast %55 : vector<1x64xf32> to vector<16x64xf32>
    %57 = arith.subf %35, %56 : vector<16x64xf32>
    %58 = arith.mulf %57, %57 : vector<16x64xf32>
    %cst_34 = arith.constant dense<0.000000e+00> : vector<64xf32>
    %59 = vector.multi_reduction <add>, %58, %cst_34 [0] : vector<16x64xf32> to vector<64xf32>
    %60 = vector.shape_cast %59 : vector<64xf32> to vector<1x64xf32>
    %61 = vector.extract_strided_slice %60 {offsets = [0, 0], sizes = [1, 8], strides = [1, 1]} : vector<1x64xf32> to vector<1x8xf32>
    %62 = vector.extract_strided_slice %60 {offsets = [0, 8], sizes = [1, 8], strides = [1, 1]} : vector<1x64xf32> to vector<1x8xf32>
    %63 = arith.addf %61, %62 : vector<1x8xf32>
    %64 = vector.extract_strided_slice %60 {offsets = [0, 16], sizes = [1, 8], strides = [1, 1]} : vector<1x64xf32> to vector<1x8xf32>
    %65 = arith.addf %63, %64 : vector<1x8xf32>
    %66 = vector.extract_strided_slice %60 {offsets = [0, 24], sizes = [1, 8], strides = [1, 1]} : vector<1x64xf32> to vector<1x8xf32>
    %67 = arith.addf %65, %66 : vector<1x8xf32>
    %68 = vector.extract_strided_slice %60 {offsets = [0, 32], sizes = [1, 8], strides = [1, 1]} : vector<1x64xf32> to vector<1x8xf32>
    %69 = arith.addf %67, %68 : vector<1x8xf32>
    %70 = vector.extract_strided_slice %60 {offsets = [0, 40], sizes = [1, 8], strides = [1, 1]} : vector<1x64xf32> to vector<1x8xf32>
    %71 = arith.addf %69, %70 : vector<1x8xf32>
    %72 = vector.extract_strided_slice %60 {offsets = [0, 48], sizes = [1, 8], strides = [1, 1]} : vector<1x64xf32> to vector<1x8xf32>
    %73 = arith.addf %71, %72 : vector<1x8xf32>
    %74 = vector.extract_strided_slice %60 {offsets = [0, 56], sizes = [1, 8], strides = [1, 1]} : vector<1x64xf32> to vector<1x8xf32>
    %75 = arith.addf %73, %74 : vector<1x8xf32>
    %cst_35 = arith.constant 7.812500e-03 : f32
    %76 = vector.broadcast %cst_35 : f32 to vector<1x8xf32>
    %77 = arith.mulf %75, %76 : vector<1x8xf32>
    %78 = tpu.concatenate %77, %77, %77, %77, %77, %77, %77, %77 in 1 : vector<1x8xf32>, vector<1x8xf32>, vector<1x8xf32>, vector<1x8xf32>, vector<1x8xf32>, vector<1x8xf32>, vector<1x8xf32>, vector<1x8xf32> -> vector<1x64xf32>
    %cst_36 = arith.constant 9.99999974E-6 : f32
    %79 = vector.broadcast %cst_36 : f32 to vector<1x64xf32>
    %80 = arith.addf %78, %79 : vector<1x64xf32>
    %81 = math.rsqrt %80 : vector<1x64xf32>
    %82 = vector.broadcast %81 : vector<1x64xf32> to vector<16x64xf32>
    %83 = arith.mulf %57, %82 : vector<16x64xf32>
    %c0_37 = arith.constant 0 : index
    %c0_38 = arith.constant 0 : index
    %84 = vector.load %arg2[%c0_37, %c0_38] : memref<1x64xf32, #tpu.memory_space<vmem>>, vector<1x64xf32>
    %85 = vector.broadcast %84 : vector<1x64xf32> to vector<16x64xf32>
    %86 = arith.mulf %83, %85 : vector<16x64xf32>
    %c0_39 = arith.constant 0 : index
    %c0_40 = arith.constant 0 : index
    %87 = vector.load %arg3[%c0_39, %c0_40] : memref<1x64xf32, #tpu.memory_space<vmem>>, vector<1x64xf32>
    %88 = vector.broadcast %87 : vector<1x64xf32> to vector<16x64xf32>
    %89 = arith.addf %86, %88 : vector<16x64xf32>
    %cst_41 = arith.constant 0.000000e+00 : f32
    %90 = vector.broadcast %cst_41 : f32 to vector<16x64xf32>
    %91 = arith.maximumf %89, %90 : vector<16x64xf32>
    %cst_42 = arith.constant 0.000000e+00 : bf16
    %92 = vector.broadcast %cst_42 : bf16 to vector<16x8xbf16>
    %93 = arith.truncf %91 : vector<16x64xf32> to vector<16x64xbf16>
    %94 = tpu.concatenate %92, %93, %92 in 1 : vector<16x8xbf16>, vector<16x64xbf16>, vector<16x8xbf16> -> vector<16x80xbf16>
    %95 = vector.shape_cast %94 : vector<16x80xbf16> to vector<2x8x80xbf16>
    %c0_43 = arith.constant 0 : index
    %c1_44 = arith.constant 1 : index
    %c0_45 = arith.constant 0 : index
    %96 = vector.load %arg9[%c0_43, %c1_44, %c0_45] : memref<2x10x80xbf16, #tpu.memory_space<vmem>>, vector<2x8x80xbf16>
    tpu.vector_store %arg9[%c0_43, %c1_44, %c0_45], %95 {strides = array<i32>} : memref<2x10x80xbf16, #tpu.memory_space<vmem>>, vector<2x8x80xbf16>,
    %cst_46 = arith.constant 0.000000e+00 : bf16
    %97 = vector.broadcast %cst_46 : bf16 to vector<2x1x80xbf16>
    %c0_47 = arith.constant 0 : index
    %c0_48 = arith.constant 0 : index
    %c0_49 = arith.constant 0 : index
    %98 = vector.load %arg9[%c0_47, %c0_48, %c0_49] : memref<2x10x80xbf16, #tpu.memory_space<vmem>>, vector<2x1x80xbf16>
    tpu.vector_store %arg9[%c0_47, %c0_48, %c0_49], %97 {strides = array<i32>} : memref<2x10x80xbf16, #tpu.memory_space<vmem>>, vector<2x1x80xbf16>,
    %c0_50 = arith.constant 0 : index
    %c9_51 = arith.constant 9 : index
    %c0_52 = arith.constant 0 : index
    %99 = vector.load %arg9[%c0_50, %c9_51, %c0_52] : memref<2x10x80xbf16, #tpu.memory_space<vmem>>, vector<2x1x80xbf16>
    tpu.vector_store %arg9[%c0_50, %c9_51, %c0_52], %97 {strides = array<i32>} : memref<2x10x80xbf16, #tpu.memory_space<vmem>>, vector<2x1x80xbf16>,
    %c0_53 = arith.constant 0 : index
    %c0_54 = arith.constant 0 : index
    %c0_55 = arith.constant 0 : index
    %100 = vector.load %arg9[%c0_53, %c0_54, %c0_55] : memref<2x10x80xbf16, #tpu.memory_space<vmem>>, vector<2x8x80xbf16>
    %101 = vector.shape_cast %100 : vector<2x8x80xbf16> to vector<16x80xbf16>
    %c0_56 = arith.constant 0 : index
    %c0_57 = arith.constant 0 : index
    %c0_58 = arith.constant 0 : index
    %102 = vector.load %arg4[%c0_56, %c0_57, %c0_58] : memref<3x80x64xbf16, #tpu.memory_space<vmem>>, vector<1x80x64xbf16>
    %103 = vector.shape_cast %102 : vector<1x80x64xbf16> to vector<80x64xbf16>
    %cst_59 = arith.constant dense<0.000000e+00> : vector<16x64xf32>
    %104 = tpu.matmul %101, %103, %cst_59 {dimension_numbers = #tpu.dot_dimension_numbers<[1], [0], [0], [1], [0, 0, 1, 1], [], []>} : vector<16x80xbf16>, vector<80x64xbf16>, vector<16x64xf32> -> vector<16x64xf32>
    %c0_60 = arith.constant 0 : index
    %c1_61 = arith.constant 1 : index
    %c0_62 = arith.constant 0 : index
    %105 = vector.load %arg9[%c0_60, %c1_61, %c0_62] : memref<2x10x80xbf16, #tpu.memory_space<vmem>>, vector<2x8x80xbf16>
    %106 = vector.shape_cast %105 : vector<2x8x80xbf16> to vector<16x80xbf16>
    %c1_63 = arith.constant 1 : index
    %c0_64 = arith.constant 0 : index
    %c0_65 = arith.constant 0 : index
    %107 = vector.load %arg4[%c1_63, %c0_64, %c0_65] : memref<3x80x64xbf16, #tpu.memory_space<vmem>>, vector<1x80x64xbf16>
    %108 = vector.shape_cast %107 : vector<1x80x64xbf16> to vector<80x64xbf16>
    %cst_66 = arith.constant dense<0.000000e+00> : vector<16x64xf32>
    %109 = tpu.matmul %106, %108, %cst_66 {dimension_numbers = #tpu.dot_dimension_numbers<[1], [0], [0], [1], [0, 0, 1, 1], [], []>} : vector<16x80xbf16>, vector<80x64xbf16>, vector<16x64xf32> -> vector<16x64xf32>
    %110 = arith.addf %104, %109 : vector<16x64xf32>
    %c0_67 = arith.constant 0 : index
    %c2_68 = arith.constant 2 : index
    %c0_69 = arith.constant 0 : index
    %111 = vector.load %arg9[%c0_67, %c2_68, %c0_69] : memref<2x10x80xbf16, #tpu.memory_space<vmem>>, vector<2x8x80xbf16>
    %112 = vector.shape_cast %111 : vector<2x8x80xbf16> to vector<16x80xbf16>
    %c2_70 = arith.constant 2 : index
    %c0_71 = arith.constant 0 : index
    %c0_72 = arith.constant 0 : index
    %113 = vector.load %arg4[%c2_70, %c0_71, %c0_72] : memref<3x80x64xbf16, #tpu.memory_space<vmem>>, vector<1x80x64xbf16>
    %114 = vector.shape_cast %113 : vector<1x80x64xbf16> to vector<80x64xbf16>
    %cst_73 = arith.constant dense<0.000000e+00> : vector<16x64xf32>
    %115 = tpu.matmul %112, %114, %cst_73 {dimension_numbers = #tpu.dot_dimension_numbers<[1], [0], [0], [1], [0, 0, 1, 1], [], []>} : vector<16x80xbf16>, vector<80x64xbf16>, vector<16x64xf32> -> vector<16x64xf32>
    %116 = arith.addf %110, %115 : vector<16x64xf32>
    %cst_74 = arith.constant dense<0.000000e+00> : vector<64xf32>
    %117 = vector.multi_reduction <add>, %116, %cst_74 [0] : vector<16x64xf32> to vector<64xf32>
    %118 = vector.shape_cast %117 : vector<64xf32> to vector<1x64xf32>
    %119 = vector.extract_strided_slice %118 {offsets = [0, 0], sizes = [1, 8], strides = [1, 1]} : vector<1x64xf32> to vector<1x8xf32>
    %120 = vector.extract_strided_slice %118 {offsets = [0, 8], sizes = [1, 8], strides = [1, 1]} : vector<1x64xf32> to vector<1x8xf32>
    %121 = arith.addf %119, %120 : vector<1x8xf32>
    %122 = vector.extract_strided_slice %118 {offsets = [0, 16], sizes = [1, 8], strides = [1, 1]} : vector<1x64xf32> to vector<1x8xf32>
    %123 = arith.addf %121, %122 : vector<1x8xf32>
    %124 = vector.extract_strided_slice %118 {offsets = [0, 24], sizes = [1, 8], strides = [1, 1]} : vector<1x64xf32> to vector<1x8xf32>
    %125 = arith.addf %123, %124 : vector<1x8xf32>
    %126 = vector.extract_strided_slice %118 {offsets = [0, 32], sizes = [1, 8], strides = [1, 1]} : vector<1x64xf32> to vector<1x8xf32>
    %127 = arith.addf %125, %126 : vector<1x8xf32>
    %128 = vector.extract_strided_slice %118 {offsets = [0, 40], sizes = [1, 8], strides = [1, 1]} : vector<1x64xf32> to vector<1x8xf32>
    %129 = arith.addf %127, %128 : vector<1x8xf32>
    %130 = vector.extract_strided_slice %118 {offsets = [0, 48], sizes = [1, 8], strides = [1, 1]} : vector<1x64xf32> to vector<1x8xf32>
    %131 = arith.addf %129, %130 : vector<1x8xf32>
    %132 = vector.extract_strided_slice %118 {offsets = [0, 56], sizes = [1, 8], strides = [1, 1]} : vector<1x64xf32> to vector<1x8xf32>
    %133 = arith.addf %131, %132 : vector<1x8xf32>
    %cst_75 = arith.constant 7.812500e-03 : f32
    %134 = vector.broadcast %cst_75 : f32 to vector<1x8xf32>
    %135 = arith.mulf %133, %134 : vector<1x8xf32>
    %136 = tpu.concatenate %135, %135, %135, %135, %135, %135, %135, %135 in 1 : vector<1x8xf32>, vector<1x8xf32>, vector<1x8xf32>, vector<1x8xf32>, vector<1x8xf32>, vector<1x8xf32>, vector<1x8xf32>, vector<1x8xf32> -> vector<1x64xf32>
    %137 = vector.broadcast %136 : vector<1x64xf32> to vector<16x64xf32>
    %138 = arith.subf %116, %137 : vector<16x64xf32>
    %139 = arith.mulf %138, %138 : vector<16x64xf32>
    %cst_76 = arith.constant dense<0.000000e+00> : vector<64xf32>
    %140 = vector.multi_reduction <add>, %139, %cst_76 [0] : vector<16x64xf32> to vector<64xf32>
    %141 = vector.shape_cast %140 : vector<64xf32> to vector<1x64xf32>
    %142 = vector.extract_strided_slice %141 {offsets = [0, 0], sizes = [1, 8], strides = [1, 1]} : vector<1x64xf32> to vector<1x8xf32>
    %143 = vector.extract_strided_slice %141 {offsets = [0, 8], sizes = [1, 8], strides = [1, 1]} : vector<1x64xf32> to vector<1x8xf32>
    %144 = arith.addf %142, %143 : vector<1x8xf32>
    %145 = vector.extract_strided_slice %141 {offsets = [0, 16], sizes = [1, 8], strides = [1, 1]} : vector<1x64xf32> to vector<1x8xf32>
    %146 = arith.addf %144, %145 : vector<1x8xf32>
    %147 = vector.extract_strided_slice %141 {offsets = [0, 24], sizes = [1, 8], strides = [1, 1]} : vector<1x64xf32> to vector<1x8xf32>
    %148 = arith.addf %146, %147 : vector<1x8xf32>
    %149 = vector.extract_strided_slice %141 {offsets = [0, 32], sizes = [1, 8], strides = [1, 1]} : vector<1x64xf32> to vector<1x8xf32>
    %150 = arith.addf %148, %149 : vector<1x8xf32>
    %151 = vector.extract_strided_slice %141 {offsets = [0, 40], sizes = [1, 8], strides = [1, 1]} : vector<1x64xf32> to vector<1x8xf32>
    %152 = arith.addf %150, %151 : vector<1x8xf32>
    %153 = vector.extract_strided_slice %141 {offsets = [0, 48], sizes = [1, 8], strides = [1, 1]} : vector<1x64xf32> to vector<1x8xf32>
    %154 = arith.addf %152, %153 : vector<1x8xf32>
    %155 = vector.extract_strided_slice %141 {offsets = [0, 56], sizes = [1, 8], strides = [1, 1]} : vector<1x64xf32> to vector<1x8xf32>
    %156 = arith.addf %154, %155 : vector<1x8xf32>
    %cst_77 = arith.constant 7.812500e-03 : f32
    %157 = vector.broadcast %cst_77 : f32 to vector<1x8xf32>
    %158 = arith.mulf %156, %157 : vector<1x8xf32>
    %159 = tpu.concatenate %158, %158, %158, %158, %158, %158, %158, %158 in 1 : vector<1x8xf32>, vector<1x8xf32>, vector<1x8xf32>, vector<1x8xf32>, vector<1x8xf32>, vector<1x8xf32>, vector<1x8xf32>, vector<1x8xf32> -> vector<1x64xf32>
    %cst_78 = arith.constant 9.99999974E-6 : f32
    %160 = vector.broadcast %cst_78 : f32 to vector<1x64xf32>
    %161 = arith.addf %159, %160 : vector<1x64xf32>
    %162 = math.rsqrt %161 : vector<1x64xf32>
    %163 = vector.broadcast %162 : vector<1x64xf32> to vector<16x64xf32>
    %164 = arith.mulf %138, %163 : vector<16x64xf32>
    %c0_79 = arith.constant 0 : index
    %c0_80 = arith.constant 0 : index
    %165 = vector.load %arg5[%c0_79, %c0_80] : memref<1x64xf32, #tpu.memory_space<vmem>>, vector<1x64xf32>
    %166 = vector.broadcast %165 : vector<1x64xf32> to vector<16x64xf32>
    %167 = arith.mulf %164, %166 : vector<16x64xf32>
    %c0_81 = arith.constant 0 : index
    %c0_82 = arith.constant 0 : index
    %168 = vector.load %arg6[%c0_81, %c0_82] : memref<1x64xf32, #tpu.memory_space<vmem>>, vector<1x64xf32>
    %169 = vector.broadcast %168 : vector<1x64xf32> to vector<16x64xf32>
    %170 = arith.addf %167, %169 : vector<16x64xf32>
    %cst_83 = arith.constant 0.000000e+00 : f32
    %171 = vector.broadcast %cst_83 : f32 to vector<16x64xf32>
    %172 = arith.maximumf %170, %171 : vector<16x64xf32>
    %c0_84 = arith.constant 0 : index
    %c0_85 = arith.constant 0 : index
    %173 = vector.load %arg7[%c0_84, %c0_85] : memref<16x64xf32, #tpu.memory_space<vmem>>, vector<16x64xf32>
    tpu.vector_store %arg7[%c0_84, %c0_85], %172 {strides = array<i32>} : memref<16x64xf32, #tpu.memory_space<vmem>>, vector<16x64xf32>,
    return
  }
}

</mosaic_0001>

<llo_original>
// kernel: tpu_custom_call.1
$region0: #{tpu_custom_call.1}
  #allocation0 [shape = 'u32[]', space=smem, size = 0x4, offset = 0x4, fixed_abs, tag = 'smem constant byte address 0x4 - core index']
  #allocation1 [shape = 'u32[144,128]{1,0:T(1,128)}', space=vmem, size = 0x12000, scoped, tag = 'internal scratch']
  #allocation2 [shape = 'bf16[2,10,40]{2,1,0:T(8,128)(2,1)}', space=vmem, size = 0x2000, scoped, tag = 'scratch operand']
  #allocation3 [shape = 'bf16[2,10,80]{2,1,0:T(8,128)(2,1)}', space=vmem, size = 0x2000, scoped, tag = 'scratch operand']
  %s0 = inlined_call_operand.vmem [shape: bf16[16,128], index: 0, kind: input, shape index: {}]
  %s1 = inlined_call_operand.vmem [shape: bf16[3,40,64], index: 1, kind: input, shape index: {}]
  %s2 = inlined_call_operand.vmem [shape: f32[1,64], index: 2, kind: input, shape index: {}]
  %s3 = inlined_call_operand.vmem [shape: f32[1,64], index: 3, kind: input, shape index: {}]
  %s4 = inlined_call_operand.vmem [shape: bf16[3,80,64], index: 4, kind: input, shape index: {}]
  %s5 = inlined_call_operand.vmem [shape: f32[1,64], index: 5, kind: input, shape index: {}]
  %s6 = inlined_call_operand.vmem [shape: f32[1,64], index: 6, kind: input, shape index: {}]
  %s7 = inlined_call_operand.hbm [shape: f32[16,64], index: 7, kind: output, shape index: {}]
  %s8 = sld [smem:[#allocation0]]
  $region38: #{tpu_custom_call.1} parent=0
    _
  %s10 = ssub.s32 1, %s8
  %s11 = scalar_select 0, %s10, %s8
  $region1: #{tpu_custom_call.1} parent=0
    #allocation4 [shape = 'u8[8192]{0}', space=vmem, size = 0x2000, scoped, tag = 'output window, operand 0, single buffered']
    #allocation5 [shape = 's32[1]{0}', space=sflag, size = 0x4, scoped, tag = 'scoped memory for tpu_custom_call.1']
    %12 = vsyncpa [#allocation5], 0
    // Predicated region
    $region2: #{tpu_custom_call.1} parent=1 // pred_check
      _
    $region3: #{tpu_custom_call.1} parent=1 // pred_check_branch
      %14 = sbr.rel (0) target = $region5
    $region4: #{tpu_custom_call.1} parent=1 // pred_region
      _
    $region5: #{tpu_custom_call.1} parent=1 // pred_fallthru
      _
    // Predicated region
    $region6: #{tpu_custom_call.1} parent=1 // pred_check
      _
    $region7: #{tpu_custom_call.1} parent=1 // pred_check_branch
      %16 = sbr.rel (0) target = $region9
    $region8: #{tpu_custom_call.1} parent=1 // pred_region
      _
    $region9: #{tpu_custom_call.1} parent=1 // pred_fallthru
      _
    // Predicated region
    $region10: #{tpu_custom_call.1} parent=1 // pred_check
      _
    $region11: #{tpu_custom_call.1} parent=1 // pred_check_branch
      %18 = sbr.rel (0) target = $region13
    $region12: #{tpu_custom_call.1} parent=1 // pred_region
      _
    $region13: #{tpu_custom_call.1} parent=1 // pred_fallthru
      _
    // Predicated region
    $region14: #{tpu_custom_call.1} parent=1 // pred_check
      _
    $region15: #{tpu_custom_call.1} parent=1 // pred_check_branch
      %20 = sbr.rel (0) target = $region17
    $region16: #{tpu_custom_call.1} parent=1 // pred_region
      _
    $region17: #{tpu_custom_call.1} parent=1 // pred_fallthru
      _
    // Predicated region
    $region18: #{tpu_custom_call.1} parent=1 // pred_check
      _
    $region19: #{tpu_custom_call.1} parent=1 // pred_check_branch
      %22 = sbr.rel (0) target = $region21
    $region20: #{tpu_custom_call.1} parent=1 // pred_region
      _
    $region21: #{tpu_custom_call.1} parent=1 // pred_fallthru
      _
    // Predicated region
    $region22: #{tpu_custom_call.1} parent=1 // pred_check
      _
    $region23: #{tpu_custom_call.1} parent=1 // pred_check_branch
      %24 = sbr.rel (0) target = $region25
    $region24: #{tpu_custom_call.1} parent=1 // pred_region
      _
    $region25: #{tpu_custom_call.1} parent=1 // pred_fallthru
      _
    // Predicated region
    $region26: #{tpu_custom_call.1} parent=1 // pred_check
      _
    $region27: #{tpu_custom_call.1} parent=1 // pred_check_branch
      %26 = sbr.rel (0) target = $region29
    $region28: #{tpu_custom_call.1} parent=1 // pred_region
      _
    $region29: #{tpu_custom_call.1} parent=1 // pred_fallthru
      _
    %v28 = vld [vmem:[%s0] sm:$0xf]
    %v29 = vld [vmem:[%s0 + $0x4] sm:$0xf]
    %v30 = vunpack.c.l.bf16 %v28
    %v31 = vunpack.c.l.bf16 %v29
    %34 = vrot.lane.b32.xlu0 %v30, 96
    %v35 = vpop.permute.xlu0 %34
    %36 = vrot.lane.b32.xlu0 %v31, 96
    %v37 = vpop.permute.xlu0 %36
    %v40 = vmax.f32 %v30, %v35
    %v41 = vmax.f32 %v31, %v37
    %44 = vrot.lane.b32.xlu0 %v40, 64
    %v45 = vpop.permute.xlu0 %44
    %46 = vrot.lane.b32.xlu0 %v41, 64
    %v47 = vpop.permute.xlu0 %46
    %v50 = vmax.f32 %v40, %v45
    %v51 = vmax.f32 %v41, %v47
    %v52 = vpack.c.bf16 %v51, %v50
    %54 = vrot.lane.b32.xlu0 %v52, 4
    %v55 = vpop.permute.xlu0 %54
    %vm56 = vcmask 31744
    %v59 = vsel %vm56, 0, %v55
    %vm60 = vcmask 293888
    %v61 = vsel %vm60, %v59, 0
    %v63 = vunpack.c.l.b16 %v61
    %v64 = vunpack.c.h.b16 %v61
    %v65 = vpack.c.b16 %v63, %v63
    %v66 = vpack.c.b16 %v64, %v64
    %v68 = vshrl.u32 %v65, 16
    %v70 = vrot.slane %v68, 7
    %v71 = vshll.u32 %v65, 16
    %v73 = vor.u32 %v70, %v71
    %v74 = vrot.slane %v70, 4
    %v76 = vshrl.u32 %v66, 16
    %v78 = vrot.slane %v76, 7
    %v79 = vshll.u32 %v66, 16
    %v81 = vor.u32 %v78, %v79
    %v82 = vrot.slane %v78, 4
    %vm87 = vcmask 322560
    %vm88 = vsmask.f32 7938
    %vm89 = vmand %vm87, %vm88
    %v90 = vld [vmem:[#allocation2] sm:$0xf]
    %v91 = vsel %vm89, %v73, %v90
    %92 = vst [vmem:[#allocation2] sm:$0xf] %v91
    %vm93 = vcmask 319488
    %vm94 = vsmask.f32 256
    %vm95 = vmand %vm93, %vm94
    %v96 = vld [vmem:[#allocation2 + $0x4] sm:$0x1]
    %v97 = vsel %vm95, %v74, %v96
    %98 = vst [vmem:[#allocation2 + $0x4] sm:$0x1] %v97
    %v99 = vld [vmem:[#allocation2 + $0x8] sm:$0xf]
    %v100 = vsel %vm89, %v81, %v99
    %101 = vst [vmem:[#allocation2 + $0x8] sm:$0xf] %v100
    %v102 = vld [vmem:[#allocation2 + $0xc] sm:$0x1]
    %v103 = vsel %vm95, %v82, %v102
    %104 = vst [vmem:[#allocation2 + $0xc] sm:$0x1] %v103
    %v105 = vld [vmem:[#allocation2] sm:$0x1]
    %v106 = vsel %vm95, 0, %v105
    %107 = vst [vmem:[#allocation2] sm:$0x1] %v106
    %v108 = vld [vmem:[#allocation2 + $0x8] sm:$0x1]
    %v109 = vsel %vm95, 0, %v108
    %110 = vst [vmem:[#allocation2 + $0x8] sm:$0x1] %v109
    %vm111 = vmand %vm93, %vm88
    %v112 = vld [vmem:[#allocation2 + $0x4] sm:$0x1]
    %v113 = vsel %vm111, 0, %v112
    %114 = vst [vmem:[#allocation2 + $0x4] sm:$0x1] %v113
    %v115 = vld [vmem:[#allocation2 + $0xc] sm:$0x1]
    %v116 = vsel %vm111, 0, %v115
    %117 = vst [vmem:[#allocation2 + $0xc] sm:$0x1] %v116
    %v118 = vld [vmem:[#allocation2] sm:$0xf]
    %v119 = vld [vmem:[#allocation2 + $0x8] sm:$0xf]
    %v120 = vld [vmem:[%s1] sm:$0xf]
    %v121 = vld [vmem:[%s1 + $0x4] sm:$0xf]
    %v122 = vld [vmem:[%s1 + $0x8] sm:$0xf]
    %v123 = vld [vmem:[%s1 + $0xc] sm:$0xf]
    %v124 = vld [vmem:[%s1 + $0x10] sm:$0xf]
    %v125 = vld [vmem:[#allocation2 + $0x4] sm:$0x1]
    %v126 = vld [vmem:[#allocation2 + $0xc] sm:$0x1]
    %vm127 = vsmask.f32 3328
    %vm128 = vsmask.f32 7440
    %vm129 = vmor %vm127, %vm128
    %v131 = vshrl.u32 %v118, 16
    %v133 = vrot.slane %v131, 4
    %v134 = vshll.u32 %v118, 16
    %v136 = vrot.slane %v134, 5
    %v137 = vor.u32 %v133, %v136
    %v138 = vrot.slane %v137, 4
    %v140 = vshll.u32 %v125, 16
    %v142 = vrot.slane %v140, 5
    %v143 = vsel %vm129, %v138, %v142
    %v145 = vshrl.u32 %v119, 16
    %v147 = vrot.slane %v145, 4
    %v148 = vshll.u32 %v119, 16
    %v150 = vrot.slane %v148, 5
    %v151 = vor.u32 %v147, %v150
    %v152 = vrot.slane %v151, 4
    %v154 = vshll.u32 %v126, 16
    %v156 = vrot.slane %v154, 5
    %v157 = vsel %vm129, %v152, %v156
    %s158 = scalar_lea.vmem %s1, 20
    %v159 = vld [vmem:[%s158] sm:$0xf]
    %v160 = vld [vmem:[%s158 + $0x4] sm:$0xf]
    %v161 = vld [vmem:[%s158 + $0x8] sm:$0xf]
    %v162 = vld [vmem:[%s158 + $0xc] sm:$0xf]
    %v163 = vld [vmem:[%s158 + $0x10] sm:$0xf]
    %v164 = vunpack.c.l.b16 %v143
    %v165 = vunpack.c.l.b16 %v157
    %v166 = vpack.c.b16 %v165, %v164
    %v172 = vunpack.c.l.b16 %v159
    %v173 = vunpack.c.l.b16 %v160
    %v174 = vunpack.c.l.b16 %v161
    %v175 = vunpack.c.l.b16 %v162
    %v176 = vunpack.c.l.b16 %v163
    %v177 = vpack.c.b16 %v173, %v172
    %v178 = vpack.c.b16 %v175, %v174
    %v179 = vpack.c.b16 %v176, %v176
    %vm182 = vcmask 326656
    %v184 = vsel %vm182, %v166, 0
    %vm186 = vcmask 1043456
    %v188 = vsel %vm186, %v179, 0
    %190 = vmatprep.subr.bf16.mxu0 0
    %191 = vmatpush1.bf16.msra.mxu0 %v177
    %192 = vmatprep.subr.bf16.mxu0 0
    %193 = vmatpush1.bf16.msra.mxu0 %v178
    %194 = vmatprep.subr.bf16.mxu0 0
    %195 = vmatpush1.bf16.msra.mxu0 %v188
    %196 = vmatprep.subr.bf16.mxu0 0
    %197 = vmatpush1.bf16.msra.mxu0 0
    %198 = vmatprep.subr.bf16.mxu0 0
    %199 = vmatpush1.bf16.msra.mxu0 0
    %200 = vmatprep.subr.bf16.mxu0 0
    %201 = vmatpush1.bf16.msra.mxu0 0
    %202 = vmatprep.subr.bf16.mxu0 0
    %203 = vmatpush1.bf16.msra.mxu0 0
    %204 = vmatprep.subr.bf16.mxu0 0
    %205 = vmatpush1.bf16.msra.mxu0 0
    %206 = vmatprep.subr.bf16.mxu0 0
    %207 = vmatpush1.bf16.msra.mxu0 0
    %208 = vmatprep.subr.bf16.mxu0 0
    %209 = vmatpush1.bf16.msra.mxu0 0
    %210 = vmatprep.subr.bf16.mxu0 0
    %211 = vmatpush1.bf16.msra.mxu0 0
    %212 = vmatprep.subr.bf16.mxu0 0
    %213 = vmatpush1.bf16.msra.mxu0 0
    %214 = vmatprep.subr.bf16.mxu0 0
    %215 = vmatpush1.bf16.msra.mxu0 0
    %216 = vmatprep.subr.bf16.mxu0 0
    %217 = vmatpush1.bf16.msra.mxu0 0
    %218 = vmatprep.subr.bf16.mxu0 0
    %219 = vmatpush1.bf16.msra.mxu0 0
    %220 = vmatprep.subr.bf16.mxu0 0
    %221 = vmatpush1.bf16.msra.mxu0 0
    %222 = vmatprep.mubr.bf16.mxu0 0
    %223 = vmatmul.mubr.bf16.gmra.mrb[0].mxu0 %v184
    %v224 = vpop.f32.mrb[0].mxu0
    %v225 = vadd.f32 0.0, %v224
    %v226 = vpop.f32.mrb[0].mxu0
    %v227 = vpop.f32.mrb[0].mxu0
    %v228 = vadd.f32 0.0, %v227
    %v229 = vpop.f32.mrb[0].mxu0
    %230 = vdwg.mxu0
    %v233 = vunpack.c.l.b16 %v118
    %v234 = vunpack.c.l.b16 %v119
    %v235 = vpack.c.b16 %v234, %v233
    %v241 = vunpack.c.l.b16 %v120
    %v242 = vunpack.c.l.b16 %v121
    %v243 = vunpack.c.l.b16 %v122
    %v244 = vunpack.c.l.b16 %v123
    %v245 = vunpack.c.l.b16 %v124
    %v246 = vpack.c.b16 %v242, %v241
    %v247 = vpack.c.b16 %v244, %v243
    %v248 = vpack.c.b16 %v245, %v245
    %v252 = vsel %vm182, %v235, 0
    %v255 = vsel %vm186, %v248, 0
    %257 = vmatprep.subr.bf16.mxu0 0
    %258 = vmatpush1.bf16.msra.mxu0 %v246
    %259 = vmatprep.subr.bf16.mxu0 0
    %260 = vmatpush1.bf16.msra.mxu0 %v247
    %261 = vmatprep.subr.bf16.mxu0 0
    %262 = vmatpush1.bf16.msra.mxu0 %v255
    %263 = vmatprep.subr.bf16.mxu0 0
    %264 = vmatpush1.bf16.msra.mxu0 0
    %265 = vmatprep.subr.bf16.mxu0 0
    %266 = vmatpush1.bf16.msra.mxu0 0
    %267 = vmatprep.subr.bf16.mxu0 0
    %268 = vmatpush1.bf16.msra.mxu0 0
    %269 = vmatprep.subr.bf16.mxu0 0
    %270 = vmatpush1.bf16.msra.mxu0 0
    %271 = vmatprep.subr.bf16.mxu0 0
    %272 = vmatpush1.bf16.msra.mxu0 0
    %273 = vmatprep.subr.bf16.mxu0 0
    %274 = vmatpush1.bf16.msra.mxu0 0
    %275 = vmatprep.subr.bf16.mxu0 0
    %276 = vmatpush1.bf16.msra.mxu0 0
    %277 = vmatprep.subr.bf16.mxu0 0
    %278 = vmatpush1.bf16.msra.mxu0 0
    %279 = vmatprep.subr.bf16.mxu0 0
    %280 = vmatpush1.bf16.msra.mxu0 0
    %281 = vmatprep.subr.bf16.mxu0 0
    %282 = vmatpush1.bf16.msra.mxu0 0
    %283 = vmatprep.subr.bf16.mxu0 0
    %284 = vmatpush1.bf16.msra.mxu0 0
    %285 = vmatprep.subr.bf16.mxu0 0
    %286 = vmatpush1.bf16.msra.mxu0 0
    %287 = vmatprep.subr.bf16.mxu0 0
    %288 = vmatpush1.bf16.msra.mxu0 0
    %289 = vmatprep.mubr.bf16.mxu0 0
    %290 = vmatmul.mubr.bf16.gmra.mrb[0].mxu0 %v252
    %v291 = vpop.f32.mrb[0].mxu0
    %v292 = vadd.f32 %v225, %v291
    %v293 = vpop.f32.mrb[0].mxu0
    %v294 = vpop.f32.mrb[0].mxu0
    %v295 = vadd.f32 %v228, %v294
    %v296 = vpop.f32.mrb[0].mxu0
    %297 = vdwg.mxu0
    %v298 = vld [vmem:[#allocation2] sm:$0xe]
    %v299 = vld [vmem:[#allocation2 + $0x8] sm:$0xe]
    %vm304 = vcmask 1042432
    %vm305 = vcmask 1046532
    %vm306 = vmor %vm304, %vm305
    %v307 = vrot.slane %v298, 5
    %v308 = vrot.slane %v307, 4
    %v309 = vrot.slane %v125, 5
    %v310 = vsel %vm306, %v308, %v309
    %v311 = vrot.slane %v299, 5
    %v312 = vrot.slane %v311, 4
    %v313 = vrot.slane %v126, 5
    %v314 = vsel %vm306, %v312, %v313
    %s315 = scalar_lea.vmem %s1, 40
    %v316 = vld [vmem:[%s315] sm:$0xf]
    %v317 = vld [vmem:[%s315 + $0x4] sm:$0xf]
    %v318 = vld [vmem:[%s315 + $0x8] sm:$0xf]
    %v319 = vld [vmem:[%s315 + $0xc] sm:$0xf]
    %v320 = vld [vmem:[%s315 + $0x10] sm:$0xf]
    %v321 = vunpack.c.l.b16 %v310
    %v322 = vunpack.c.l.b16 %v314
    %v323 = vpack.c.b16 %v322, %v321
    %v329 = vunpack.c.l.b16 %v316
    %v330 = vunpack.c.l.b16 %v317
    %v331 = vunpack.c.l.b16 %v318
    %v332 = vunpack.c.l.b16 %v319
    %v333 = vunpack.c.l.b16 %v320
    %v334 = vpack.c.b16 %v330, %v329
    %v335 = vpack.c.b16 %v332, %v331
    %v336 = vpack.c.b16 %v333, %v333
    %v340 = vsel %vm182, %v323, 0
    %v343 = vsel %vm186, %v336, 0
    %345 = vmatprep.subr.bf16.mxu0 0
    %346 = vmatpush1.bf16.msra.mxu0 %v334
    %347 = vmatprep.subr.bf16.mxu0 0
    %348 = vmatpush1.bf16.msra.mxu0 %v335
    %349 = vmatprep.subr.bf16.mxu0 0
    %350 = vmatpush1.bf16.msra.mxu0 %v343
    %351 = vmatprep.subr.bf16.mxu0 0
    %352 = vmatpush1.bf16.msra.mxu0 0
    %353 = vmatprep.subr.bf16.mxu0 0
    %354 = vmatpush1.bf16.msra.mxu0 0
    %355 = vmatprep.subr.bf16.mxu0 0
    %356 = vmatpush1.bf16.msra.mxu0 0
    %357 = vmatprep.subr.bf16.mxu0 0
    %358 = vmatpush1.bf16.msra.mxu0 0
    %359 = vmatprep.subr.bf16.mxu0 0
    %360 = vmatpush1.bf16.msra.mxu0 0
    %361 = vmatprep.subr.bf16.mxu0 0
    %362 = vmatpush1.bf16.msra.mxu0 0
    %363 = vmatprep.subr.bf16.mxu0 0
    %364 = vmatpush1.bf16.msra.mxu0 0
    %365 = vmatprep.subr.bf16.mxu0 0
    %366 = vmatpush1.bf16.msra.mxu0 0
    %367 = vmatprep.subr.bf16.mxu0 0
    %368 = vmatpush1.bf16.msra.mxu0 0
    %369 = vmatprep.subr.bf16.mxu0 0
    %370 = vmatpush1.bf16.msra.mxu0 0
    %371 = vmatprep.subr.bf16.mxu0 0
    %372 = vmatpush1.bf16.msra.mxu0 0
    %373 = vmatprep.subr.bf16.mxu0 0
    %374 = vmatpush1.bf16.msra.mxu0 0
    %375 = vmatprep.subr.bf16.mxu0 0
    %376 = vmatpush1.bf16.msra.mxu0 0
    %377 = vmatprep.mubr.bf16.mxu0 0
    %378 = vmatmul.mubr.bf16.gmra.mrb[0].mxu0 %v340
    %v379 = vpop.f32.mrb[0].mxu0
    %v380 = vadd.f32 0.0, %v379
    %v381 = vpop.f32.mrb[0].mxu0
    %v382 = vpop.f32.mrb[0].mxu0
    %v383 = vadd.f32 0.0, %v382
    %v384 = vpop.f32.mrb[0].mxu0
    %385 = vdwg.mxu0
    %v386 = vadd.f32 %v292, %v380
    %v387 = vadd.f32 %v295, %v383
    %vm388 = vcmask 523264
    %v389 = vsel %vm388, %v386, 0.0
    %v390 = vsel %vm388, %v387, 0.0
    %v391 = vadd.f32 %v389, %v390
    %v392 = vrot.slane %v391, 4
    %v393 = vadd.f32 %v391, %v392
    %v394 = vrot.slane %v393, 2
    %v395 = vadd.f32 %v393, %v394
    %v396 = vrot.slane %v395, 1
    %v397 = vadd.f32 %v395, %v396
    %399 = vrot.lane.b32.xlu0 %v397, 120
    %v400 = vpop.permute.xlu0 %399
    %v402 = vadd.f32 %v397, %v400
    %403 = vrot.lane.b32.xlu0 %v397, 112
    %v404 = vpop.permute.xlu0 %403
    %v406 = vadd.f32 %v402, %v404
    %407 = vrot.lane.b32.xlu0 %v397, 104
    %v408 = vpop.permute.xlu0 %407
    %v410 = vadd.f32 %v406, %v408
    %411 = vrot.lane.b32.xlu0 %v397, 96
    %v412 = vpop.permute.xlu0 %411
    %v414 = vadd.f32 %v410, %v412
    %415 = vrot.lane.b32.xlu0 %v397, 88
    %v416 = vpop.permute.xlu0 %415
    %v418 = vadd.f32 %v414, %v416
    %419 = vrot.lane.b32.xlu0 %v397, 80
    %v420 = vpop.permute.xlu0 %419
    %v422 = vadd.f32 %v418, %v420
    %423 = vrot.lane.b32.xlu0 %v397, 72
    %v424 = vpop.permute.xlu0 %423
    %v426 = vadd.f32 %v422, %v424
    %v427 = vmul.f32 %v426, 0.0078125
    %429 = vrot.lane.b32.xlu0 %v427, 8
    %v430 = vpop.permute.xlu0 %429
    %432 = vrot.lane.b32.xlu0 %v427, 16
    %v433 = vpop.permute.xlu0 %432
    %435 = vrot.lane.b32.xlu0 %v427, 24
    %v436 = vpop.permute.xlu0 %435
    %438 = vrot.lane.b32.xlu0 %v427, 32
    %v439 = vpop.permute.xlu0 %438
    %441 = vrot.lane.b32.xlu0 %v427, 40
    %v442 = vpop.permute.xlu0 %441
    %444 = vrot.lane.b32.xlu0 %v427, 48
    %v445 = vpop.permute.xlu0 %444
    %447 = vrot.lane.b32.xlu0 %v427, 56
    %v448 = vpop.permute.xlu0 %447
    %vm450 = vcmask 64512
    %v451 = vsel %vm450, %v427, %v430
    %vm452 = vcmask 130048
    %v453 = vsel %vm452, %v451, %v433
    %vm454 = vcmask 195584
    %v455 = vsel %vm454, %v453, %v436
    %vm456 = vcmask 261120
    %v457 = vsel %vm456, %v455, %v439
    %v458 = vsel %vm182, %v457, %v442
    %vm459 = vcmask 392192
    %v460 = vsel %vm459, %v458, %v445
    %vm461 = vcmask 457728
    %v462 = vsel %vm461, %v460, %v448
    %v463 = vlaneseq
    %v464 = vshrl.u32 %v463, 7
    %v465 = vsub.s32 0, %v464
    %v466 = vrot.slane %v462, %v465
    %v467 = vsub.f32 %v386, %v466
    %v468 = vsub.f32 %v387, %v466
    %v469 = vmul.f32 %v467, %v467
    %v470 = vmul.f32 %v468, %v468
    %v471 = vsel %vm388, %v469, 0.0
    %v472 = vsel %vm388, %v470, 0.0
    %v473 = vadd.f32 %v471, %v472
    %v474 = vrot.slane %v473, 4
    %v475 = vadd.f32 %v473, %v474
    %v476 = vrot.slane %v475, 2
    %v477 = vadd.f32 %v475, %v476
    %v478 = vrot.slane %v477, 1
    %v479 = vadd.f32 %v477, %v478
    %481 = vrot.lane.b32.xlu0 %v479, 120
    %v482 = vpop.permute.xlu0 %481
    %v484 = vadd.f32 %v479, %v482
    %485 = vrot.lane.b32.xlu0 %v479, 112
    %v486 = vpop.permute.xlu0 %485
    %v488 = vadd.f32 %v484, %v486
    %489 = vrot.lane.b32.xlu0 %v479, 104
    %v490 = vpop.permute.xlu0 %489
    %v492 = vadd.f32 %v488, %v490
    %493 = vrot.lane.b32.xlu0 %v479, 96
    %v494 = vpop.permute.xlu0 %493
    %v496 = vadd.f32 %v492, %v494
    %497 = vrot.lane.b32.xlu0 %v479, 88
    %v498 = vpop.permute.xlu0 %497
    %v500 = vadd.f32 %v496, %v498
    %501 = vrot.lane.b32.xlu0 %v479, 80
    %v502 = vpop.permute.xlu0 %501
    %v504 = vadd.f32 %v500, %v502
    %505 = vrot.lane.b32.xlu0 %v479, 72
    %v506 = vpop.permute.xlu0 %505
    %v508 = vadd.f32 %v504, %v506
    %v509 = vmul.f32 %v508, 0.0078125
    %511 = vrot.lane.b32.xlu0 %v509, 8
    %v512 = vpop.permute.xlu0 %511
    %514 = vrot.lane.b32.xlu0 %v509, 16
    %v515 = vpop.permute.xlu0 %514
    %517 = vrot.lane.b32.xlu0 %v509, 24
    %v518 = vpop.permute.xlu0 %517
    %520 = vrot.lane.b32.xlu0 %v509, 32
    %v521 = vpop.permute.xlu0 %520
    %523 = vrot.lane.b32.xlu0 %v509, 40
    %v524 = vpop.permute.xlu0 %523
    %526 = vrot.lane.b32.xlu0 %v509, 48
    %v527 = vpop.permute.xlu0 %526
    %529 = vrot.lane.b32.xlu0 %v509, 56
    %v530 = vpop.permute.xlu0 %529
    %v532 = vsel %vm450, %v509, %v512
    %v533 = vsel %vm452, %v532, %v515
    %v534 = vsel %vm454, %v533, %v518
    %v535 = vsel %vm456, %v534, %v521
    %v536 = vsel %vm182, %v535, %v524
    %v537 = vsel %vm459, %v536, %v527
    %v538 = vsel %vm461, %v537, %v530
    %v539 = vadd.f32 %v538, 1e-05
    %v540 = vrsqrt.pop %v539
    %v541 = vlaneseq
    %v542 = vshrl.u32 %v541, 7
    %v543 = vsub.s32 0, %v542
    %v544 = vrot.slane %v540, %v543
    %v545 = vmul.f32 %v467, %v544
    %v546 = vmul.f32 %v468, %v544
    %v547 = vld [vmem:[%s2] sm:$0x1]
    %v549 = vlaneseq
    %v550 = vshrl.u32 %v549, 7
    %v551 = vsub.s32 0, %v550
    %v552 = vrot.slane %v547, %v551
    %v554 = vmul.f32 %v545, %v552
    %v555 = vmul.f32 %v546, %v552
    %v556 = vld [vmem:[%s3] sm:$0x1]
    %v558 = vlaneseq
    %v559 = vshrl.u32 %v558, 7
    %v560 = vsub.s32 0, %v559
    %v561 = vrot.slane %v556, %v560
    %v563 = vadd.f32 %v554, %v561
    %v564 = vadd.f32 %v555, %v561
    %v565 = vmax.f32 %v563, 0.0
    %v566 = vmax.f32 %v564, 0.0
    %v567 = vpack.c.bf16 %v566, %v565
    %569 = vrot.lane.b32.xlu0 %v567, 8
    %v570 = vpop.permute.xlu0 %569
    %v572 = vsel %vm450, 0, %v570
    %vm573 = vcmask 588800
    %v574 = vsel %vm573, %v572, 0
    %v576 = vunpack.c.l.b16 %v574
    %v577 = vunpack.c.h.b16 %v574
    %v578 = vpack.c.b16 %v576, %v576
    %v579 = vpack.c.b16 %v577, %v577
    %v581 = vshrl.u32 %v578, 16
    %v583 = vrot.slane %v581, 7
    %v584 = vshll.u32 %v578, 16
    %v586 = vor.u32 %v583, %v584
    %v587 = vrot.slane %v583, 4
    %v589 = vshrl.u32 %v579, 16
    %v591 = vrot.slane %v589, 7
    %v592 = vshll.u32 %v579, 16
    %v594 = vor.u32 %v591, %v592
    %v595 = vrot.slane %v591, 4
    %vm600 = vcmask 650240
    %vm601 = vmand %vm600, %vm88
    %v602 = vld [vmem:[#allocation3] sm:$0xf]
    %v603 = vsel %vm601, %v586, %v602
    %604 = vst [vmem:[#allocation3] sm:$0xf] %v603
    %vm605 = vcmask 647168
    %vm606 = vmand %vm605, %vm94
    %v607 = vld [vmem:[#allocation3 + $0x4] sm:$0x1]
    %v608 = vsel %vm606, %v587, %v607
    %609 = vst [vmem:[#allocation3 + $0x4] sm:$0x1] %v608
    %v610 = vld [vmem:[#allocation3 + $0x8] sm:$0xf]
    %v611 = vsel %vm601, %v594, %v610
    %612 = vst [vmem:[#allocation3 + $0x8] sm:$0xf] %v611
    %v613 = vld [vmem:[#allocation3 + $0xc] sm:$0x1]
    %v614 = vsel %vm606, %v595, %v613
    %615 = vst [vmem:[#allocation3 + $0xc] sm:$0x1] %v614
    %v616 = vld [vmem:[#allocation3] sm:$0x1]
    %v617 = vsel %vm606, 0, %v616
    %618 = vst [vmem:[#allocation3] sm:$0x1] %v617
    %v619 = vld [vmem:[#allocation3 + $0x8] sm:$0x1]
    %v620 = vsel %vm606, 0, %v619
    %621 = vst [vmem:[#allocation3 + $0x8] sm:$0x1] %v620
    %vm622 = vmand %vm605, %vm88
    %v623 = vld [vmem:[#allocation3 + $0x4] sm:$0x1]
    %v624 = vsel %vm622, 0, %v623
    %625 = vst [vmem:[#allocation3 + $0x4] sm:$0x1] %v624
    %v626 = vld [vmem:[#allocation3 + $0xc] sm:$0x1]
    %v627 = vsel %vm622, 0, %v626
    %628 = vst [vmem:[#allocation3 + $0xc] sm:$0x1] %v627
    %v629 = vld [vmem:[#allocation3] sm:$0xf]
    %v630 = vld [vmem:[#allocation3 + $0x8] sm:$0xf]
    %v631 = vld [vmem:[%s4] sm:$0xf]
    %v632 = vld [vmem:[%s4 + $0x4] sm:$0xf]
    %v633 = vld [vmem:[%s4 + $0x8] sm:$0xf]
    %v634 = vld [vmem:[%s4 + $0xc] sm:$0xf]
    %v635 = vld [vmem:[%s4 + $0x10] sm:$0xf]
    %v636 = vld [vmem:[%s4 + $0x14] sm:$0xf]
    %v637 = vld [vmem:[%s4 + $0x18] sm:$0xf]
    %v638 = vld [vmem:[%s4 + $0x1c] sm:$0xf]
    %v639 = vld [vmem:[%s4 + $0x20] sm:$0xf]
    %v640 = vld [vmem:[%s4 + $0x24] sm:$0xf]
    %v641 = vld [vmem:[#allocation3 + $0x4] sm:$0x1]
    %v642 = vld [vmem:[#allocation3 + $0xc] sm:$0x1]
    %v644 = vshrl.u32 %v629, 16
    %v646 = vrot.slane %v644, 4
    %v647 = vshll.u32 %v629, 16
    %v649 = vrot.slane %v647, 5
    %v650 = vor.u32 %v646, %v649
    %v651 = vrot.slane %v650, 4
    %v653 = vshll.u32 %v641, 16
    %v655 = vrot.slane %v653, 5
    %v656 = vsel %vm129, %v651, %v655
    %v658 = vshrl.u32 %v630, 16
    %v660 = vrot.slane %v658, 4
    %v661 = vshll.u32 %v630, 16
    %v663 = vrot.slane %v661, 5
    %v664 = vor.u32 %v660, %v663
    %v665 = vrot.slane %v664, 4
    %v667 = vshll.u32 %v642, 16
    %v669 = vrot.slane %v667, 5
    %v670 = vsel %vm129, %v665, %v669
    %s671 = scalar_lea.vmem %s4, 40
    %v672 = vld [vmem:[%s671] sm:$0xf]
    %v673 = vld [vmem:[%s671 + $0x4] sm:$0xf]
    %v674 = vld [vmem:[%s671 + $0x8] sm:$0xf]
    %v675 = vld [vmem:[%s671 + $0xc] sm:$0xf]
    %v676 = vld [vmem:[%s671 + $0x10] sm:$0xf]
    %v677 = vld [vmem:[%s671 + $0x14] sm:$0xf]
    %v678 = vld [vmem:[%s671 + $0x18] sm:$0xf]
    %v679 = vld [vmem:[%s671 + $0x1c] sm:$0xf]
    %v680 = vld [vmem:[%s671 + $0x20] sm:$0xf]
    %v681 = vld [vmem:[%s671 + $0x24] sm:$0xf]
    %v682 = vunpack.c.l.b16 %v656
    %v683 = vunpack.c.l.b16 %v670
    %v684 = vpack.c.b16 %v683, %v682
    %v695 = vunpack.c.l.b16 %v672
    %v696 = vunpack.c.l.b16 %v673
    %v697 = vunpack.c.l.b16 %v674
    %v698 = vunpack.c.l.b16 %v675
    %v699 = vunpack.c.l.b16 %v676
    %v700 = vunpack.c.l.b16 %v677
    %v701 = vunpack.c.l.b16 %v678
    %v702 = vunpack.c.l.b16 %v679
    %v703 = vunpack.c.l.b16 %v680
    %v704 = vunpack.c.l.b16 %v681
    %v705 = vpack.c.b16 %v696, %v695
    %v706 = vpack.c.b16 %v698, %v697
    %v707 = vpack.c.b16 %v700, %v699
    %v708 = vpack.c.b16 %v702, %v701
    %v709 = vpack.c.b16 %v704, %v703
    %vm715 = vcmask 654336
    %v717 = vsel %vm715, %v684, 0
    %719 = vmatprep.subr.bf16.mxu0 0
    %720 = vmatpush1.bf16.msra.mxu0 %v705
    %721 = vmatprep.subr.bf16.mxu0 0
    %722 = vmatpush1.bf16.msra.mxu0 %v706
    %723 = vmatprep.subr.bf16.mxu0 0
    %724 = vmatpush1.bf16.msra.mxu0 %v707
    %725 = vmatprep.subr.bf16.mxu0 0
    %726 = vmatpush1.bf16.msra.mxu0 %v708
    %727 = vmatprep.subr.bf16.mxu0 0
    %728 = vmatpush1.bf16.msra.mxu0 %v709
    %729 = vmatprep.subr.bf16.mxu0 0
    %730 = vmatpush1.bf16.msra.mxu0 0
    %731 = vmatprep.subr.bf16.mxu0 0
    %732 = vmatpush1.bf16.msra.mxu0 0
    %733 = vmatprep.subr.bf16.mxu0 0
    %734 = vmatpush1.bf16.msra.mxu0 0
    %735 = vmatprep.subr.bf16.mxu0 0
    %736 = vmatpush1.bf16.msra.mxu0 0
    %737 = vmatprep.subr.bf16.mxu0 0
    %738 = vmatpush1.bf16.msra.mxu0 0
    %739 = vmatprep.subr.bf16.mxu0 0
    %740 = vmatpush1.bf16.msra.mxu0 0
    %741 = vmatprep.subr.bf16.mxu0 0
    %742 = vmatpush1.bf16.msra.mxu0 0
    %743 = vmatprep.subr.bf16.mxu0 0
    %744 = vmatpush1.bf16.msra.mxu0 0
    %745 = vmatprep.subr.bf16.mxu0 0
    %746 = vmatpush1.bf16.msra.mxu0 0
    %747 = vmatprep.subr.bf16.mxu0 0
    %748 = vmatpush1.bf16.msra.mxu0 0
    %749 = vmatprep.subr.bf16.mxu0 0
    %750 = vmatpush1.bf16.msra.mxu0 0
    %751 = vmatprep.mubr.bf16.mxu0 0
    %752 = vmatmul.mubr.bf16.gmra.mrb[0].mxu0 %v717
    %v753 = vpop.f32.mrb[0].mxu0
    %v754 = vadd.f32 0.0, %v753
    %v755 = vpop.f32.mrb[0].mxu0
    %v756 = vpop.f32.mrb[0].mxu0
    %v757 = vadd.f32 0.0, %v756
    %v758 = vpop.f32.mrb[0].mxu0
    %759 = vdwg.mxu0
    %v762 = vunpack.c.l.b16 %v629
    %v763 = vunpack.c.l.b16 %v630
    %v764 = vpack.c.b16 %v763, %v762
    %v775 = vunpack.c.l.b16 %v631
    %v776 = vunpack.c.l.b16 %v632
    %v777 = vunpack.c.l.b16 %v633
    %v778 = vunpack.c.l.b16 %v634
    %v779 = vunpack.c.l.b16 %v635
    %v780 = vunpack.c.l.b16 %v636
    %v781 = vunpack.c.l.b16 %v637
    %v782 = vunpack.c.l.b16 %v638
    %v783 = vunpack.c.l.b16 %v639
    %v784 = vunpack.c.l.b16 %v640
    %v785 = vpack.c.b16 %v776, %v775
    %v786 = vpack.c.b16 %v778, %v777
    %v787 = vpack.c.b16 %v780, %v779
    %v788 = vpack.c.b16 %v782, %v781
    %v789 = vpack.c.b16 %v784, %v783
    %v796 = vsel %vm715, %v764, 0
    %798 = vmatprep.subr.bf16.mxu0 0
    %799 = vmatpush1.bf16.msra.mxu0 %v785
    %800 = vmatprep.subr.bf16.mxu0 0
    %801 = vmatpush1.bf16.msra.mxu0 %v786
    %802 = vmatprep.subr.bf16.mxu0 0
    %803 = vmatpush1.bf16.msra.mxu0 %v787
    %804 = vmatprep.subr.bf16.mxu0 0
    %805 = vmatpush1.bf16.msra.mxu0 %v788
    %806 = vmatprep.subr.bf16.mxu0 0
    %807 = vmatpush1.bf16.msra.mxu0 %v789
    %808 = vmatprep.subr.bf16.mxu0 0
    %809 = vmatpush1.bf16.msra.mxu0 0
    %810 = vmatprep.subr.bf16.mxu0 0
    %811 = vmatpush1.bf16.msra.mxu0 0
    %812 = vmatprep.subr.bf16.mxu0 0
    %813 = vmatpush1.bf16.msra.mxu0 0
    %814 = vmatprep.subr.bf16.mxu0 0
    %815 = vmatpush1.bf16.msra.mxu0 0
    %816 = vmatprep.subr.bf16.mxu0 0
    %817 = vmatpush1.bf16.msra.mxu0 0
    %818 = vmatprep.subr.bf16.mxu0 0
    %819 = vmatpush1.bf16.msra.mxu0 0
    %820 = vmatprep.subr.bf16.mxu0 0
    %821 = vmatpush1.bf16.msra.mxu0 0
    %822 = vmatprep.subr.bf16.mxu0 0
    %823 = vmatpush1.bf16.msra.mxu0 0
    %824 = vmatprep.subr.bf16.mxu0 0
    %825 = vmatpush1.bf16.msra.mxu0 0
    %826 = vmatprep.subr.bf16.mxu0 0
    %827 = vmatpush1.bf16.msra.mxu0 0
    %828 = vmatprep.subr.bf16.mxu0 0
    %829 = vmatpush1.bf16.msra.mxu0 0
    %830 = vmatprep.mubr.bf16.mxu0 0
    %831 = vmatmul.mubr.bf16.gmra.mrb[0].mxu0 %v796
    %v832 = vpop.f32.mrb[0].mxu0
    %v833 = vadd.f32 %v754, %v832
    %v834 = vpop.f32.mrb[0].mxu0
    %v835 = vpop.f32.mrb[0].mxu0
    %v836 = vadd.f32 %v757, %v835
    %v837 = vpop.f32.mrb[0].mxu0
    %838 = vdwg.mxu0
    %v839 = vld [vmem:[#allocation3] sm:$0xe]
    %v840 = vld [vmem:[#allocation3 + $0x8] sm:$0xe]
    %v845 = vrot.slane %v839, 5
    %v846 = vrot.slane %v845, 4
    %v847 = vrot.slane %v641, 5
    %v848 = vsel %vm306, %v846, %v847
    %v849 = vrot.slane %v840, 5
    %v850 = vrot.slane %v849, 4
    %v851 = vrot.slane %v642, 5
    %v852 = vsel %vm306, %v850, %v851
    %s853 = scalar_lea.vmem %s4, 80
    %v854 = vld [vmem:[%s853] sm:$0xf]
    %v855 = vld [vmem:[%s853 + $0x4] sm:$0xf]
    %v856 = vld [vmem:[%s853 + $0x8] sm:$0xf]
    %v857 = vld [vmem:[%s853 + $0xc] sm:$0xf]
    %v858 = vld [vmem:[%s853 + $0x10] sm:$0xf]
    %v859 = vld [vmem:[%s853 + $0x14] sm:$0xf]
    %v860 = vld [vmem:[%s853 + $0x18] sm:$0xf]
    %v861 = vld [vmem:[%s853 + $0x1c] sm:$0xf]
    %v862 = vld [vmem:[%s853 + $0x20] sm:$0xf]
    %v863 = vld [vmem:[%s853 + $0x24] sm:$0xf]
    %v864 = vunpack.c.l.b16 %v848
    %v865 = vunpack.c.l.b16 %v852
    %v866 = vpack.c.b16 %v865, %v864
    %v877 = vunpack.c.l.b16 %v854
    %v878 = vunpack.c.l.b16 %v855
    %v879 = vunpack.c.l.b16 %v856
    %v880 = vunpack.c.l.b16 %v857
    %v881 = vunpack.c.l.b16 %v858
    %v882 = vunpack.c.l.b16 %v859
    %v883 = vunpack.c.l.b16 %v860
    %v884 = vunpack.c.l.b16 %v861
    %v885 = vunpack.c.l.b16 %v862
    %v886 = vunpack.c.l.b16 %v863
    %v887 = vpack.c.b16 %v878, %v877
    %v888 = vpack.c.b16 %v880, %v879
    %v889 = vpack.c.b16 %v882, %v881
    %v890 = vpack.c.b16 %v884, %v883
    %v891 = vpack.c.b16 %v886, %v885
    %v898 = vsel %vm715, %v866, 0
    %900 = vmatprep.subr.bf16.mxu0 0
    %901 = vmatpush1.bf16.msra.mxu0 %v887
    %902 = vmatprep.subr.bf16.mxu0 0
    %903 = vmatpush1.bf16.msra.mxu0 %v888
    %904 = vmatprep.subr.bf16.mxu0 0
    %905 = vmatpush1.bf16.msra.mxu0 %v889
    %906 = vmatprep.subr.bf16.mxu0 0
    %907 = vmatpush1.bf16.msra.mxu0 %v890
    %908 = vmatprep.subr.bf16.mxu0 0
    %909 = vmatpush1.bf16.msra.mxu0 %v891
    %910 = vmatprep.subr.bf16.mxu0 0
    %911 = vmatpush1.bf16.msra.mxu0 0
    %912 = vmatprep.subr.bf16.mxu0 0
    %913 = vmatpush1.bf16.msra.mxu0 0
    %914 = vmatprep.subr.bf16.mxu0 0
    %915 = vmatpush1.bf16.msra.mxu0 0
    %916 = vmatprep.subr.bf16.mxu0 0
    %917 = vmatpush1.bf16.msra.mxu0 0
    %918 = vmatprep.subr.bf16.mxu0 0
    %919 = vmatpush1.bf16.msra.mxu0 0
    %920 = vmatprep.subr.bf16.mxu0 0
    %921 = vmatpush1.bf16.msra.mxu0 0
    %922 = vmatprep.subr.bf16.mxu0 0
    %923 = vmatpush1.bf16.msra.mxu0 0
    %924 = vmatprep.subr.bf16.mxu0 0
    %925 = vmatpush1.bf16.msra.mxu0 0
    %926 = vmatprep.subr.bf16.mxu0 0
    %927 = vmatpush1.bf16.msra.mxu0 0
    %928 = vmatprep.subr.bf16.mxu0 0
    %929 = vmatpush1.bf16.msra.mxu0 0
    %930 = vmatprep.subr.bf16.mxu0 0
    %931 = vmatpush1.bf16.msra.mxu0 0
    %932 = vmatprep.mubr.bf16.mxu0 0
    %933 = vmatmul.mubr.bf16.gmra.mrb[0].mxu0 %v898
    %v934 = vpop.f32.mrb[0].mxu0
    %v935 = vadd.f32 0.0, %v934
    %v936 = vpop.f32.mrb[0].mxu0
    %v937 = vpop.f32.mrb[0].mxu0
    %v938 = vadd.f32 0.0, %v937
    %v939 = vpop.f32.mrb[0].mxu0
    %940 = vdwg.mxu0
    %v941 = vadd.f32 %v833, %v935
    %v942 = vadd.f32 %v836, %v938
    %v943 = vsel %vm388, %v941, 0.0
    %v944 = vsel %vm388, %v942, 0.0
    %v945 = vadd.f32 %v943, %v944
    %v946 = vrot.slane %v945, 4
    %v947 = vadd.f32 %v945, %v946
    %v948 = vrot.slane %v947, 2
    %v949 = vadd.f32 %v947, %v948
    %v950 = vrot.slane %v949, 1
    %v951 = vadd.f32 %v949, %v950
    %953 = vrot.lane.b32.xlu0 %v951, 120
    %v954 = vpop.permute.xlu0 %953
    %v956 = vadd.f32 %v951, %v954
    %957 = vrot.lane.b32.xlu0 %v951, 112
    %v958 = vpop.permute.xlu0 %957
    %v960 = vadd.f32 %v956, %v958
    %961 = vrot.lane.b32.xlu0 %v951, 104
    %v962 = vpop.permute.xlu0 %961
    %v964 = vadd.f32 %v960, %v962
    %965 = vrot.lane.b32.xlu0 %v951, 96
    %v966 = vpop.permute.xlu0 %965
    %v968 = vadd.f32 %v964, %v966
    %969 = vrot.lane.b32.xlu0 %v951, 88
    %v970 = vpop.permute.xlu0 %969
    %v972 = vadd.f32 %v968, %v970
    %973 = vrot.lane.b32.xlu0 %v951, 80
    %v974 = vpop.permute.xlu0 %973
    %v976 = vadd.f32 %v972, %v974
    %977 = vrot.lane.b32.xlu0 %v951, 72
    %v978 = vpop.permute.xlu0 %977
    %v980 = vadd.f32 %v976, %v978
    %v981 = vmul.f32 %v980, 0.0078125
    %983 = vrot.lane.b32.xlu0 %v981, 8
    %v984 = vpop.permute.xlu0 %983
    %986 = vrot.lane.b32.xlu0 %v981, 16
    %v987 = vpop.permute.xlu0 %986
    %989 = vrot.lane.b32.xlu0 %v981, 24
    %v990 = vpop.permute.xlu0 %989
    %992 = vrot.lane.b32.xlu0 %v981, 32
    %v993 = vpop.permute.xlu0 %992
    %995 = vrot.lane.b32.xlu0 %v981, 40
    %v996 = vpop.permute.xlu0 %995
    %998 = vrot.lane.b32.xlu0 %v981, 48
    %v999 = vpop.permute.xlu0 %998
    %1001 = vrot.lane.b32.xlu0 %v981, 56
    %v1002 = vpop.permute.xlu0 %1001
    %v1004 = vsel %vm450, %v981, %v984
    %v1005 = vsel %vm452, %v1004, %v987
    %v1006 = vsel %vm454, %v1005, %v990
    %v1007 = vsel %vm456, %v1006, %v993
    %v1008 = vsel %vm182, %v1007, %v996
    %v1009 = vsel %vm459, %v1008, %v999
    %v1010 = vsel %vm461, %v1009, %v1002
    %v1011 = vlaneseq
    %v1012 = vshrl.u32 %v1011, 7
    %v1013 = vsub.s32 0, %v1012
    %v1014 = vrot.slane %v1010, %v1013
    %v1015 = vsub.f32 %v941, %v1014
    %v1016 = vsub.f32 %v942, %v1014
    %v1017 = vmul.f32 %v1015, %v1015
    %v1018 = vmul.f32 %v1016, %v1016
    %v1019 = vsel %vm388, %v1017, 0.0
    %v1020 = vsel %vm388, %v1018, 0.0
    %v1021 = vadd.f32 %v1019, %v1020
    %v1022 = vrot.slane %v1021, 4
    %v1023 = vadd.f32 %v1021, %v1022
    %v1024 = vrot.slane %v1023, 2
    %v1025 = vadd.f32 %v1023, %v1024
    %v1026 = vrot.slane %v1025, 1
    %v1027 = vadd.f32 %v1025, %v1026
    %1029 = vrot.lane.b32.xlu0 %v1027, 120
    %v1030 = vpop.permute.xlu0 %1029
    %v1032 = vadd.f32 %v1027, %v1030
    %1033 = vrot.lane.b32.xlu0 %v1027, 112
    %v1034 = vpop.permute.xlu0 %1033
    %v1036 = vadd.f32 %v1032, %v1034
    %1037 = vrot.lane.b32.xlu0 %v1027, 104
    %v1038 = vpop.permute.xlu0 %1037
    %v1040 = vadd.f32 %v1036, %v1038
    %1041 = vrot.lane.b32.xlu0 %v1027, 96
    %v1042 = vpop.permute.xlu0 %1041
    %v1044 = vadd.f32 %v1040, %v1042
    %1045 = vrot.lane.b32.xlu0 %v1027, 88
    %v1046 = vpop.permute.xlu0 %1045
    %v1048 = vadd.f32 %v1044, %v1046
    %1049 = vrot.lane.b32.xlu0 %v1027, 80
    %v1050 = vpop.permute.xlu0 %1049
    %v1052 = vadd.f32 %v1048, %v1050
    %1053 = vrot.lane.b32.xlu0 %v1027, 72
    %v1054 = vpop.permute.xlu0 %1053
    %v1056 = vadd.f32 %v1052, %v1054
    %v1057 = vmul.f32 %v1056, 0.0078125
    %1059 = vrot.lane.b32.xlu0 %v1057, 8
    %v1060 = vpop.permute.xlu0 %1059
    %1062 = vrot.lane.b32.xlu0 %v1057, 16
    %v1063 = vpop.permute.xlu0 %1062
    %1065 = vrot.lane.b32.xlu0 %v1057, 24
    %v1066 = vpop.permute.xlu0 %1065
    %1068 = vrot.lane.b32.xlu0 %v1057, 32
    %v1069 = vpop.permute.xlu0 %1068
    %1071 = vrot.lane.b32.xlu0 %v1057, 40
    %v1072 = vpop.permute.xlu0 %1071
    %1074 = vrot.lane.b32.xlu0 %v1057, 48
    %v1075 = vpop.permute.xlu0 %1074
    %1077 = vrot.lane.b32.xlu0 %v1057, 56
    %v1078 = vpop.permute.xlu0 %1077
    %v1080 = vsel %vm450, %v1057, %v1060
    %v1081 = vsel %vm452, %v1080, %v1063
    %v1082 = vsel %vm454, %v1081, %v1066
    %v1083 = vsel %vm456, %v1082, %v1069
    %v1084 = vsel %vm182, %v1083, %v1072
    %v1085 = vsel %vm459, %v1084, %v1075
    %v1086 = vsel %vm461, %v1085, %v1078
    %v1087 = vadd.f32 %v1086, 1e-05
    %v1088 = vrsqrt.pop %v1087
    %v1089 = vlaneseq
    %v1090 = vshrl.u32 %v1089, 7
    %v1091 = vsub.s32 0, %v1090
    %v1092 = vrot.slane %v1088, %v1091
    %v1093 = vmul.f32 %v1015, %v1092
    %v1094 = vmul.f32 %v1016, %v1092
    %v1095 = vld [vmem:[%s5] sm:$0x1]
    %v1097 = vlaneseq
    %v1098 = vshrl.u32 %v1097, 7
    %v1099 = vsub.s32 0, %v1098
    %v1100 = vrot.slane %v1095, %v1099
    %v1102 = vmul.f32 %v1093, %v1100
    %v1103 = vmul.f32 %v1094, %v1100
    %v1104 = vld [vmem:[%s6] sm:$0x1]
    %v1106 = vlaneseq
    %v1107 = vshrl.u32 %v1106, 7
    %v1108 = vsub.s32 0, %v1107
    %v1109 = vrot.slane %v1104, %v1108
    %v1111 = vadd.f32 %v1102, %v1109
    %v1112 = vadd.f32 %v1103, %v1109
    %v1113 = vmax.f32 %v1111, 0.0
    %v1114 = vmax.f32 %v1112, 0.0
    %1115 = vst.msk [vmem:[#allocation4] sm:$0xff] %vm388, %v1113
    %1116 = vst.msk [vmem:[#allocation4 + $0x8] sm:$0xff] %vm388, %v1114
    // Predicated region
    $region30: #{tpu_custom_call.1} parent=1 // pred_check
      _
    $region31: #{tpu_custom_call.1} parent=1 // pred_check_branch
      %1118 = sbr.rel (0) target = $region33
    $region32: #{tpu_custom_call.1} parent=1 // pred_region
      %s1120 = ssub.s32 256, 256
      %1121 = vsyncadd [#allocation5], %s1120
      %s1122 = sshll.u32 [#allocation4], 4
      %s1123 = int_to_ptr.vmem [resolvable:$true] %s1122
      %1128 = dma.vmem_to_hbm [thread:$0]  %s1123, 256, %s7, [#allocation5], 128, 128, 8
    $region33: #{tpu_custom_call.1} parent=1 // pred_fallthru
      _
    // Predicated region
    $region34: #{tpu_custom_call.1} parent=1 // pred_check
      _
    $region35: #{tpu_custom_call.1} parent=1 // pred_check_branch
      %1130 = sbr.rel (0) target = $region37
    $region36: #{tpu_custom_call.1} parent=1 // pred_region
      %1131 = dma.done [#allocation5], 256
    $region37: #{tpu_custom_call.1} parent=1 // pred_fallthru
      _
    %1132 = vsyncpa [#allocation5], 1

</llo_original>
